<compile_context>
chip_gen: v7x
topology: tpu7x:2x2x1
jax: 0.10.0
libtpu: 0.0.40
codegen_flags: <defaults>
</compile_context>

<pallas_src>
import functools
from typing import NamedTuple

import jax
import jax.numpy as jnp
from jax import lax
from jax.experimental import pallas as pl
from jax.experimental.pallas import tpu as pltpu

PAD = 0


class State(NamedTuple):
    hidden: tuple        # (h_n [L,B,H], c_n [L,B,H])
    context: jnp.ndarray
    batch_first: bool = False


def _round_up(x, m):
    return ((x + m - 1) // m) * m


def _vmem_limit_bytes():
    """~75% of physical VMEM: ~96 MB on v5e/v6e (128 MiB), ~48 MB on v7x (64 MiB)."""
    cap = 64 * 1024 * 1024
    try:
        info = pltpu.get_tpu_info()
        cap = getattr(info, "vmem_capacity_bytes", cap) or cap
    except Exception:
        pass
    return int(cap) * 3 // 4


# ----------------------------------------------------------------------------
# Tiled GEMM kernel:  y = x @ w^T + b,  w supplied un-transposed as [N, K].
# Used for (a) the hoisted input projection and (b) the tied classifier.
# ----------------------------------------------------------------------------
def _linear_kernel(x_ref, w_ref, b_ref, o_ref):
    acc = lax.dot_general(
        x_ref[...], w_ref[...],
        dimension_numbers=(((1,), (1,)), ((), ())),       # contract K of both
        preferred_element_type=jnp.float32)
    o_ref[...] = (acc + b_ref[...].astype(jnp.float32)).astype(o_ref.dtype)


def linear_forward(x, w, b, *, tm_target=512, tn_target=512,
                   matmul_dtype=jnp.bfloat16, out_dtype=jnp.float32,
                   vmem_limit_bytes=None):
    """x [M, K], w [N, K], b [N] -> [M, N].  Tiled over (M, N); K kept whole.

    - bf16 MXU inputs by default (f32 accumulation on the MXU).
    - M is padded to a multiple of 8/tm and N to a multiple of 128/tn (no
      full-extent fallback), result is sliced back -> always lane-dense tiles.
    - x's index_map is constant along the inner (N) grid axis, so the
      activation tile is fetched once per M-tile; with tm covering all of M
      the weight streams from HBM exactly once.
    """
    M, K = x.shape
    N, K2 = w.shape
    assert K == K2
    if vmem_limit_bytes is None:
        vmem_limit_bytes = _vmem_limit_bytes()
    if matmul_dtype is not None:
        x = x.astype(matmul_dtype)
        w = w.astype(matmul_dtype)
    b = b.astype(jnp.float32)

    x_b = jnp.dtype(x.dtype).itemsize
    w_b = jnp.dtype(w.dtype).itemsize
    o_b = jnp.dtype(out_dtype).itemsize

    tm = min(_round_up(M, 8), _round_up(tm_target, 8))
    tn = min(_round_up(N, 128), _round_up(tn_target, 128))

    budget = int(vmem_limit_bytes * 0.7)

    def footprint(tm_, tn_):
        # double-buffered inputs + double-buffered output tile + bias
        return (2 * tm_ * K * x_b + 2 * tn_ * K * w_b
                + 2 * tm_ * tn_ * o_b + 2 * tn_ * 4)

    while footprint(tm, tn) > budget and tm > 8:
        tm = max(8, _round_up(tm // 2, 8))
    while footprint(tm, tn) > budget and tn > 128:
        tn = max(128, _round_up(tn // 2, 128))

    Mp = _round_up(M, tm)
    Np = _round_up(N, tn)
    if Mp != M:
        x = jnp.pad(x, ((0, Mp - M), (0, 0)))
    if Np != N:
        w = jnp.pad(w, ((0, Np - N), (0, 0)))
        b = jnp.pad(b, (0, Np - N))
    b2 = b.reshape(1, Np)

    cost = pl.CostEstimate(
        flops=2 * Mp * Np * K,
        transcendentals=0,
        bytes_accessed=Mp * K * x_b + Np * K * w_b + Mp * Np * o_b)

    out = pl.pallas_call(
        _linear_kernel,
        out_shape=jax.ShapeDtypeStruct((Mp, Np), out_dtype),
        grid_spec=pltpu.PrefetchScalarGridSpec(
            num_scalar_prefetch=0,
            grid=(Mp // tm, Np // tn),
            in_specs=[
                pl.BlockSpec((tm, K), lambda i, j: (i, 0)),   # activations
                pl.BlockSpec((tn, K), lambda i, j: (j, 0)),   # weight [N,K] tile
                pl.BlockSpec((1, tn), lambda i, j: (0, j)),   # bias tile
            ],
            out_specs=pl.BlockSpec((tm, tn), lambda i, j: (i, j)),
        ),
        compiler_params=pltpu.CompilerParams(
            dimension_semantics=("parallel", "parallel"),
            vmem_limit_bytes=vmem_limit_bytes),
        cost_estimate=cost,
    )(x, w, b2)
    if Mp != M or Np != N:
        out = out[:M, :N]
    return out


# ----------------------------------------------------------------------------
# LSTM recurrence kernel: time-chunked grid; h/c carried in VMEM scratch.
# Input projection is already folded into gates_x, so the per-step matmul is
# only [B,H] @ [H,4H] (W_hh pre-transposed, gate order (i,f,o,g)).
# ----------------------------------------------------------------------------
def _lstm_kernel(gx_ref, whh_ref, h0_ref, c0_ref,
                 ys_ref, hT_ref, cT_ref, h_sc, c_sc, *, hidden_size, chunk):
    blk = pl.program_id(0)

    @pl.when(blk == 0)
    def _():
        h_sc[...] = h0_ref[...].astype(jnp.float32)
        c_sc[...] = c0_ref[...].astype(jnp.float32)

    H = hidden_size
    whh = whh_ref[...]                           # [H, 4H], pre-transposed

    def step(t, carry):
        h_prev = h_sc[...]
        c_prev = c_sc[...]
        # gates[B, 4H] = gates_x[t] + h_prev @ W_hh_t      (f32 accumulation)
        gates = gx_ref[t].astype(jnp.float32) + jnp.dot(
            h_prev.astype(whh.dtype), whh, preferred_element_type=jnp.float32)
        # gate order (i, f, o, g): one wide sigmoid + one tanh (f32 VPU/EUP).
        sig = jax.nn.sigmoid(gates[:, :3 * H])
        g_g = jnp.tanh(gates[:, 3 * H:])
        i_g = sig[:, 0 * H:1 * H]
        f_g = sig[:, 1 * H:2 * H]
        o_g = sig[:, 2 * H:3 * H]
        c_new = f_g * c_prev + i_g * g_g
        h_new = o_g * jnp.tanh(c_new)
        c_sc[...] = c_new
        h_sc[...] = h_new
        ys_ref[t] = h_new.astype(ys_ref.dtype)
        return carry

    lax.fori_loop(0, chunk, step, 0, unroll=True)

    @pl.when(blk == pl.num_programs(0) - 1)
    def _():
        hT_ref[...] = h_sc[...].astype(hT_ref.dtype)
        cT_ref[...] = c_sc[...].astype(cT_ref.dtype)


def lstm_forward(gates_x, w_hh_t, h0, c0, *, chunk_target=16,
                 matmul_dtype=jnp.bfloat16, ys_dtype=jnp.float32,
                 vmem_limit_bytes=None):
    """gates_x [T,B,4H] (input proj + bias applied, gate order (i,f,o,g)),
    w_hh_t [H,4H] (pre-transposed, same gate order), h0/c0 [B,H]
    -> (ys [T,B,H] in ys_dtype, h_T [B,H] f32, c_T [B,H] f32)."""
    T, B, G = gates_x.shape
    H = h0.shape[-1]
    assert G == 4 * H
    if matmul_dtype is not None:
        w_hh_t = w_hh_t.astype(matmul_dtype)
    if vmem_limit_bytes is None:
        vmem_limit_bytes = _vmem_limit_bytes()

    gx_b = jnp.dtype(gates_x.dtype).itemsize
    ys_b = jnp.dtype(ys_dtype).itemsize
    w_b = jnp.dtype(w_hh_t.dtype).itemsize
    budget = int(vmem_limit_bytes * 0.7)

    def footprint(tc_):
        return (2 * tc_ * B * G * gx_b          # gates_x chunk (double-buffered)
                + 2 * tc_ * B * H * ys_b        # ys chunk (double-buffered)
                + 2 * G * H * w_b               # resident W_hh (2 bufs by default)
                + 10 * B * H * 4)               # h0/c0 in, hT/cT out, h/c scratch

    # Time chunk: largest divisor of T <= chunk_target whose VMEM footprint
    # fits the per-generation budget (amortizes ~0.35us/step grid overhead).
    tc = 1
    for cand in range(min(T, chunk_target), 0, -1):
        if T % cand == 0 and footprint(cand) <= budget:
            tc = cand
            break

    # NOTE: W_hh/h0/c0 have constant index_maps (fetched once); single-buffering
    # them (pl.Buffered(1)) and a v7x 2-TC batch split are possible further wins.
    # TODO(synk): batch-parallel grid axis for v7x megacore (per-batch-tile h/c scratch).
    kernel = functools.partial(_lstm_kernel, hidden_size=H, chunk=tc)
    ys, hT, cT = pl.pallas_call(
        kernel,
        out_shape=(
            jax.ShapeDtypeStruct((T, B, H), ys_dtype),
            jax.ShapeDtypeStruct((B, H), jnp.float32),
            jax.ShapeDtypeStruct((B, H), jnp.float32),
        ),
        grid_spec=pltpu.PrefetchScalarGridSpec(
            num_scalar_prefetch=0,
            grid=(T // tc,),
            in_specs=[
                pl.BlockSpec((tc, B, G), lambda b: (b, 0, 0)),   # gates_x chunk
                pl.BlockSpec((H, G), lambda b: (0, 0)),          # W_hh_t (resident)
                pl.BlockSpec((B, H), lambda b: (0, 0)),          # h0
                pl.BlockSpec((B, H), lambda b: (0, 0)),          # c0
            ],
            out_specs=[
                pl.BlockSpec((tc, B, H), lambda b: (b, 0, 0)),   # ys chunk
                pl.BlockSpec((B, H), lambda b: (0, 0)),          # h_T
                pl.BlockSpec((B, H), lambda b: (0, 0)),          # c_T
            ],
            scratch_shapes=[
                pltpu.VMEM((B, H), jnp.float32),                 # h carry
                pltpu.VMEM((B, H), jnp.float32),                 # c carry
            ],
        ),
        compiler_params=pltpu.CompilerParams(
            dimension_semantics=("arbitrary",),                  # sequential carry
            vmem_limit_bytes=vmem_limit_bytes),
    )(gates_x, w_hh_t, h0, c0)
    return ys, hT, cT


# ----------------------------------------------------------------------------
# Parameter init + full forward (glue in plain JAX)
# ----------------------------------------------------------------------------
def init_params(key, vocab_size, hidden_size, embedding_size):
    assert embedding_size == hidden_size, "tie_embedding requires E == H"
    k = jax.random.split(key, 6)
    s = 0.05
    emb_w = s * jax.random.normal(k[0], (vocab_size, embedding_size), jnp.float32)
    emb_w = emb_w.at[PAD].set(0.0)                       # padding_idx row = 0
    return {
        "emb_w": emb_w,                                  # [V, E]; tied classifier weight
        "w_ih": s * jax.random.normal(k[1], (4 * hidden_size, embedding_size), jnp.float32),
        "w_hh": s * jax.random.normal(k[2], (4 * hidden_size, hidden_size), jnp.float32),
        "b_ih": s * jax.random.normal(k[3], (4 * hidden_size,), jnp.float32),
        "b_hh": s * jax.random.normal(k[4], (4 * hidden_size,), jnp.float32),
        "cls_b": s * jax.random.normal(k[5], (vocab_size,), jnp.float32),
    }


def _ifgo_to_ifog_perm(H):
    """Row permutation taking torch gate order (i,f,g,o) -> (i,f,o,g)."""
    return jnp.concatenate([
        jnp.arange(0 * H, 1 * H), jnp.arange(1 * H, 2 * H),
        jnp.arange(3 * H, 4 * H), jnp.arange(2 * H, 3 * H)])


def recurrent_decoder_forward(params, tokens, state, *, matmul_dtype=jnp.bfloat16):
    """tokens int32 [T, B]; state.hidden = (h0 [1,B,H], c0 [1,B,H]).

    matmul_dtype=jnp.bfloat16 (default) uses native MXU bf16 with f32
    accumulation and bf16 inter-kernel intermediates; pass None for a pure-f32
    path (bit-for-bit-ish parity with the reference, slower)."""
    context, hidden = state.context, state.hidden
    h0, c0 = hidden
    T, B = tokens.shape
    H = h0.shape[-1]
    V, E = params["emb_w"].shape
    inter_dtype = jnp.float32 if matmul_dtype is None else matmul_dtype

    # Embedding lookup (gather) + embedding_dropout (identity at eval).
    # TODO(synk): fuse this gather into the input-projection kernel via scalar
    # prefetch of token ids to avoid the [T,B,E] HBM intermediate.
    emb = jnp.take(params["emb_w"], tokens, axis=0)      # [T, B, E]

    # Pre-pack recurrent weights once per forward (would be done at init in
    # production): permute gate order (i,f,g,o)->(i,f,o,g) and transpose W_hh.
    perm = _ifgo_to_ifog_perm(H)
    w_ih = params["w_ih"][perm]                          # [4H, E]
    w_hh_t = params["w_hh"][perm].T                      # [H, 4H]
    bias = (params["b_ih"] + params["b_hh"])[perm]       # [4H]

    # (1) Hoisted input projection: one MXU-efficient GEMM over [T*B, E],
    #     emitted in bf16 (halves the gates_x HBM round-trip).
    gates_x = linear_forward(
        emb.reshape(T * B, E), w_ih, bias,
        matmul_dtype=matmul_dtype, out_dtype=inter_dtype,
    ).reshape(T, B, 4 * H)

    # (2) Sequential recurrence: per step only [B,H]@[H,4H] + VPU/EUP gate math.
    ys, hT, cT = lstm_forward(gates_x, w_hh_t, h0[0], c0[0],
                              matmul_dtype=matmul_dtype, ys_dtype=inter_dtype)

    # (3) dropout (identity) + tied classifier.  The activation tile covers all
    #     of T*B (capped at 2048 rows) so emb_w [V,H] streams from HBM once.
    logits = linear_forward(
        ys.reshape(T * B, H), params["emb_w"], params["cls_b"],
        tm_target=min(T * B, 2048), tn_target=512,
        matmul_dtype=matmul_dtype, out_dtype=jnp.float32,
    ).reshape(T, B, V)

    new_state = State(hidden=(hT[None], cT[None]), context=context,
                      batch_first=False)
    return logits, new_state


# ----------------------------------------------------------------------------
# Pure-JAX reference for correctness check (torch gate order / layout)
# ----------------------------------------------------------------------------
def reference_forward(params, tokens, h0, c0):
    emb = jnp.take(params["emb_w"], tokens, axis=0)
    H = h0.shape[-1]

    def step(carry, x_t):
        h, c = carry
        gates = (x_t @ params["w_ih"].T + h @ params["w_hh"].T
                 + params["b_ih"] + params["b_hh"])
        i = jax.nn.sigmoid(gates[:, 0 * H:1 * H])
        f = jax.nn.sigmoid(gates[:, 1 * H:2 * H])
        g = jnp.tanh(gates[:, 2 * H:3 * H])
        o = jax.nn.sigmoid(gates[:, 3 * H:4 * H])
        c_new = f * c + i * g
        h_new = o * jnp.tanh(c_new)
        return (h_new, c_new), h_new

    (hT, cT), ys = jax.lax.scan(step, (h0, c0), emb)
    logits = ys @ params["emb_w"].T + params["cls_b"]
    return logits, hT, cT


if __name__ == "__main__":
    # TODO(synk): PackedSequence input path (pack/unpack) is not implemented;
    # this covers the padded [T, B] tensor path of the PyTorch forward.
    T, B = 8, 8
    vocab_size, hidden_size, embedding_size = 32, 32, 32

    key = jax.random.PRNGKey(0)
    k_par, k_tok, k_h, k_c, k_ctx = jax.random.split(key, 5)

    params = init_params(k_par, vocab_size, hidden_size, embedding_size)
    tokens = jax.random.randint(k_tok, (T, B), 0, vocab_size, dtype=jnp.int32)
    h0 = 0.1 * jax.random.normal(k_h, (1, B, hidden_size), jnp.float32)
    c0 = 0.1 * jax.random.normal(k_c, (1, B, hidden_size), jnp.float32)
    context = jax.random.normal(k_ctx, (B, hidden_size), jnp.float32)

    state = State(hidden=(h0, c0), context=context, batch_first=False)

    # Default (bf16 MXU inputs + bf16 intermediates, f32 accumulation) path.
    logits, new_state = recurrent_decoder_forward(params, tokens, state)
    logits = jax.block_until_ready(logits)
    jax.block_until_ready(new_state.hidden)

    ref_logits, ref_h, ref_c = reference_forward(params, tokens, h0[0], c0[0])
    assert logits.shape == (T, B, vocab_size)
    assert new_state.hidden[0].shape == (1, B, hidden_size)
    # bf16 MXU path: loosened tolerance (expected quantization, not an error).
    assert jnp.allclose(logits, ref_logits, atol=2e-2, rtol=2e-2)
    assert jnp.allclose(new_state.hidden[0][0], ref_h, atol=2e-2, rtol=2e-2)
    assert jnp.allclose(new_state.hidden[1][0], ref_c, atol=2e-2, rtol=2e-2)

    # f32 structural check (tight tolerance) to validate kernel correctness.
    logits32, st32 = recurrent_decoder_forward(params, tokens, state,
                                               matmul_dtype=None)
    logits32 = jax.block_until_ready(logits32)
    assert jnp.allclose(logits32, ref_logits, atol=2e-5, rtol=2e-5)
    assert jnp.allclose(st32.hidden[0][0], ref_h, atol=2e-5, rtol=2e-5)
    assert jnp.allclose(st32.hidden[1][0], ref_c, atol=2e-5, rtol=2e-5)

    print("KERNEL_OK")
</pallas_src>

<mosaic_0001>
module attributes {stable_mosaic.version = 11 : i64} {
  func.func @_linear_kernel(%arg0: i32, %arg1: i32, %arg2: memref<64x32xbf16, #tpu.memory_space<vmem>>, %arg3: memref<128x32xbf16, #tpu.memory_space<vmem>>, %arg4: memref<1x128xf32, #tpu.memory_space<vmem>>, %arg5: memref<64x128xbf16, #tpu.memory_space<vmem>>) attributes {dimension_semantics = [#tpu.dimension_semantics<parallel>, #tpu.dimension_semantics<parallel>], iteration_bounds = array<i64: 1, 1>, scalar_prefetch = 0 : i64, scratch_operands = 0 : i64, tpu.core_type = #tpu.core_type<tc>, window_params = [{transform_indices = @transform_0, window_bounds = array<i64: 64, 32>}, {transform_indices = @transform_1, window_bounds = array<i64: 128, 32>}, {transform_indices = @transform_2, window_bounds = array<i64: 1, 128>}, {transform_indices = @transform_3, window_bounds = array<i64: 64, 128>}]} {
    %c0 = arith.constant 0 : index
    %c0_0 = arith.constant 0 : index
    %0 = vector.load %arg2[%c0, %c0_0] : memref<64x32xbf16, #tpu.memory_space<vmem>>, vector<64x32xbf16>
    %c0_1 = arith.constant 0 : index
    %c0_2 = arith.constant 0 : index
    %1 = vector.load %arg3[%c0_1, %c0_2] : memref<128x32xbf16, #tpu.memory_space<vmem>>, vector<128x32xbf16>
    %cst = arith.constant dense<0.000000e+00> : vector<64x128xf32>
    %2 = tpu.matmul %0, %1, %cst {dimension_numbers = #tpu.dot_dimension_numbers<[1], [1], [0], [0], [0, 0, 1, 0], [], []>} : vector<64x32xbf16>, vector<128x32xbf16>, vector<64x128xf32> -> vector<64x128xf32>
    %c0_3 = arith.constant 0 : index
    %c0_4 = arith.constant 0 : index
    %3 = vector.load %arg4[%c0_3, %c0_4] : memref<1x128xf32, #tpu.memory_space<vmem>>, vector<1x128xf32>
    %4 = vector.broadcast %3 : vector<1x128xf32> to vector<64x128xf32>
    %5 = arith.addf %2, %4 : vector<64x128xf32>
    %6 = arith.truncf %5 : vector<64x128xf32> to vector<64x128xbf16>
    %c0_5 = arith.constant 0 : index
    %c0_6 = arith.constant 0 : index
    %7 = vector.load %arg5[%c0_5, %c0_6] : memref<64x128xbf16, #tpu.memory_space<vmem>>, vector<64x128xbf16>
    tpu.vector_store %arg5[%c0_5, %c0_6], %6 {strides = array<i32>} : memref<64x128xbf16, #tpu.memory_space<vmem>>, vector<64x128xbf16>,
    return
  }
  func.func @transform_0(%arg0: i32, %arg1: i32) -> (i32, i32) {
    %c0_i32 = arith.constant 0 : i32
    %c0_i32_0 = arith.constant 0 : i32
    return %arg0, %c0_i32 : i32, i32
  }
  func.func @transform_1(%arg0: i32, %arg1: i32) -> (i32, i32) {
    %c0_i32 = arith.constant 0 : i32
    %c0_i32_0 = arith.constant 0 : i32
    return %arg1, %c0_i32 : i32, i32
  }
  func.func @transform_2(%arg0: i32, %arg1: i32) -> (i32, i32) {
    %c0_i32 = arith.constant 0 : i32
    %c0_i32_0 = arith.constant 0 : i32
    return %c0_i32, %arg1 : i32, i32
  }
  func.func @transform_3(%arg0: i32, %arg1: i32) -> (i32, i32) {
    %c0_i32 = arith.constant 0 : i32
    return %arg0, %arg1 : i32, i32
  }
}

</mosaic_0001>

<llo_original>
// kernel: tpu_custom_call.1
$region0: #{tpu_custom_call.1}
  #allocation0 [shape = 'u32[]', space=smem, size = 0x4, offset = 0x4, fixed_abs, tag = 'smem constant byte address 0x4 - core index']
  #allocation1 [shape = 'u32[144,128]{1,0:T(1,128)}', space=vmem, size = 0x12000, scoped, tag = 'internal scratch']
  %s0 = inlined_call_operand.vmem [shape: bf16[64,32], index: 0, kind: input, shape index: {}]
  %s1 = inlined_call_operand.vmem [shape: bf16[128,32], index: 1, kind: input, shape index: {}]
  %s2 = inlined_call_operand.vmem [shape: f32[1,128], index: 2, kind: input, shape index: {}]
  %s3 = inlined_call_operand.hbm [shape: bf16[64,128], index: 3, kind: output, shape index: {}]
  %s4 = sld [smem:[#allocation0]]
  $region22: #{tpu_custom_call.1} parent=0
    _
  %s6 = ssub.s32 1, %s4
  %s7 = scalar_select 0, %s6, %s4
  $region1: #{tpu_custom_call.1} parent=0
    #allocation2 [shape = 'u8[16384]{0}', space=vmem, size = 0x4000, scoped, tag = 'output window, operand 0, single buffered']
    #allocation3 [shape = 's32[1]{0}', space=sflag, size = 0x4, scoped, tag = 'scoped memory for tpu_custom_call.1']
    %8 = vsyncpa [#allocation3], 0
    // Predicated region
    $region2: #{tpu_custom_call.1} parent=1 // pred_check
      _
    $region3: #{tpu_custom_call.1} parent=1 // pred_check_branch
      %10 = sbr.rel (0) target = $region5
    $region4: #{tpu_custom_call.1} parent=1 // pred_region
      _
    $region5: #{tpu_custom_call.1} parent=1 // pred_fallthru
      _
    // Predicated region
    $region6: #{tpu_custom_call.1} parent=1 // pred_check
      _
    $region7: #{tpu_custom_call.1} parent=1 // pred_check_branch
      %12 = sbr.rel (0) target = $region9
    $region8: #{tpu_custom_call.1} parent=1 // pred_region
      _
    $region9: #{tpu_custom_call.1} parent=1 // pred_fallthru
      _
    // Predicated region
    $region10: #{tpu_custom_call.1} parent=1 // pred_check
      _
    $region11: #{tpu_custom_call.1} parent=1 // pred_check_branch
      %14 = sbr.rel (0) target = $region13
    $region12: #{tpu_custom_call.1} parent=1 // pred_region
      _
    $region13: #{tpu_custom_call.1} parent=1 // pred_fallthru
      _
    %v16 = vld [vmem:[%s0] sm:$0xf]
    %v17 = vld [vmem:[%s0 + $0x4] sm:$0xf]
    %v18 = vld [vmem:[%s0 + $0x8] sm:$0xf]
    %v19 = vld [vmem:[%s0 + $0xc] sm:$0xf]
    %v20 = vld [vmem:[%s0 + $0x10] sm:$0xf]
    %v21 = vld [vmem:[%s0 + $0x14] sm:$0xf]
    %v22 = vld [vmem:[%s0 + $0x18] sm:$0xf]
    %v23 = vld [vmem:[%s0 + $0x1c] sm:$0xf]
    %v24 = vld [vmem:[%s1] sm:$0xf]
    %v25 = vld [vmem:[%s1 + $0x4] sm:$0xf]
    %v26 = vld [vmem:[%s1 + $0x8] sm:$0xf]
    %v27 = vld [vmem:[%s1 + $0xc] sm:$0xf]
    %v28 = vld [vmem:[%s1 + $0x10] sm:$0xf]
    %v29 = vld [vmem:[%s1 + $0x14] sm:$0xf]
    %v30 = vld [vmem:[%s1 + $0x18] sm:$0xf]
    %v31 = vld [vmem:[%s1 + $0x1c] sm:$0xf]
    %v32 = vld [vmem:[%s1 + $0x20] sm:$0xf]
    %v33 = vld [vmem:[%s1 + $0x24] sm:$0xf]
    %v34 = vld [vmem:[%s1 + $0x28] sm:$0xf]
    %v35 = vld [vmem:[%s1 + $0x2c] sm:$0xf]
    %v36 = vld [vmem:[%s1 + $0x30] sm:$0xf]
    %v37 = vld [vmem:[%s1 + $0x34] sm:$0xf]
    %v38 = vld [vmem:[%s1 + $0x38] sm:$0xf]
    %v39 = vld [vmem:[%s1 + $0x3c] sm:$0xf]
    %v40 = vld [vmem:[%s2] sm:$0x1]
    %v42 = vlaneseq
    %v43 = vshrl.u32 %v42, 7
    %v44 = vsub.s32 0, %v43
    %v45 = vrot.slane %v40, %v44
    %v55 = vunpack.c.l.b16 %v16
    %v56 = vunpack.c.l.b16 %v17
    %v57 = vunpack.c.l.b16 %v18
    %v58 = vunpack.c.l.b16 %v19
    %v59 = vunpack.c.l.b16 %v20
    %v60 = vunpack.c.l.b16 %v21
    %v61 = vunpack.c.l.b16 %v22
    %v62 = vunpack.c.l.b16 %v23
    %v63 = vpack.c.b16 %v56, %v55
    %v64 = vpack.c.b16 %v58, %v57
    %v65 = vpack.c.b16 %v60, %v59
    %v66 = vpack.c.b16 %v62, %v61
    %v83 = vunpack.c.l.b16 %v24
    %v84 = vunpack.c.l.b16 %v25
    %v85 = vunpack.c.l.b16 %v26
    %v86 = vunpack.c.l.b16 %v27
    %v87 = vunpack.c.l.b16 %v28
    %v88 = vunpack.c.l.b16 %v29
    %v89 = vunpack.c.l.b16 %v30
    %v90 = vunpack.c.l.b16 %v31
    %v91 = vunpack.c.l.b16 %v32
    %v92 = vunpack.c.l.b16 %v33
    %v93 = vunpack.c.l.b16 %v34
    %v94 = vunpack.c.l.b16 %v35
    %v95 = vunpack.c.l.b16 %v36
    %v96 = vunpack.c.l.b16 %v37
    %v97 = vunpack.c.l.b16 %v38
    %v98 = vunpack.c.l.b16 %v39
    %v99 = vpack.c.b16 %v84, %v83
    %v100 = vpack.c.b16 %v86, %v85
    %v101 = vpack.c.b16 %v88, %v87
    %v102 = vpack.c.b16 %v90, %v89
    %v103 = vpack.c.b16 %v92, %v91
    %v104 = vpack.c.b16 %v94, %v93
    %v105 = vpack.c.b16 %v96, %v95
    %v106 = vpack.c.b16 %v98, %v97
    %vm107 = vcmask 261120
    %v109 = vsel %vm107, %v63, 0
    %v112 = vsel %vm107, %v64, 0
    %v115 = vsel %vm107, %v65, 0
    %v118 = vsel %vm107, %v66, 0
    %v121 = vsel %vm107, %v99, 0
    %v124 = vsel %vm107, %v100, 0
    %v127 = vsel %vm107, %v101, 0
    %v130 = vsel %vm107, %v102, 0
    %v133 = vsel %vm107, %v103, 0
    %v136 = vsel %vm107, %v104, 0
    %v139 = vsel %vm107, %v105, 0
    %v142 = vsel %vm107, %v106, 0
    %144 = vmatprep.subr.bf16.mxu0 0
    %145 = vmatpush1.bf16.xpose.msra.mxu0 %v121
    %146 = vmatprep.subr.bf16.mxu0 0
    %147 = vmatpush1.bf16.xpose.msra.mxu0 %v124
    %148 = vmatprep.subr.bf16.mxu0 0
    %149 = vmatpush1.bf16.xpose.msra.mxu0 %v127
    %150 = vmatprep.subr.bf16.mxu0 0
    %151 = vmatpush1.bf16.xpose.msra.mxu0 %v130
    %152 = vmatprep.subr.bf16.mxu0 0
    %153 = vmatpush1.bf16.xpose.msra.mxu0 %v133
    %154 = vmatprep.subr.bf16.mxu0 0
    %155 = vmatpush1.bf16.xpose.msra.mxu0 %v136
    %156 = vmatprep.subr.bf16.mxu0 0
    %157 = vmatpush1.bf16.xpose.msra.mxu0 %v139
    %158 = vmatprep.subr.bf16.mxu0 0
    %159 = vmatpush1.bf16.xpose.msra.mxu0 %v142
    %160 = vmatprep.subr.bf16.mxu0 0
    %161 = vmatpush1.bf16.xpose.msra.mxu0 0
    %162 = vmatprep.subr.bf16.mxu0 0
    %163 = vmatpush1.bf16.xpose.msra.mxu0 0
    %164 = vmatprep.subr.bf16.mxu0 0
    %165 = vmatpush1.bf16.xpose.msra.mxu0 0
    %166 = vmatprep.subr.bf16.mxu0 0
    %167 = vmatpush1.bf16.xpose.msra.mxu0 0
    %168 = vmatprep.subr.bf16.mxu0 0
    %169 = vmatpush1.bf16.xpose.msra.mxu0 0
    %170 = vmatprep.subr.bf16.mxu0 0
    %171 = vmatpush1.bf16.xpose.msra.mxu0 0
    %172 = vmatprep.subr.bf16.mxu0 0
    %173 = vmatpush1.bf16.xpose.msra.mxu0 0
    %174 = vmatprep.subr.bf16.mxu0 0
    %175 = vmatpush1.bf16.xpose.msra.mxu0 0
    %176 = vmatprep.mubr.bf16.mxu0 0
    %177 = vmatmul.mubr.bf16.gmra.mrb[0].mxu0 %v109
    %v178 = vpop.f32.mrb[0].mxu0
    %v179 = vadd.f32 %v45, %v178
    %v180 = vpop.f32.mrb[0].mxu0
    %v181 = vpop.f32.mrb[0].mxu0
    %v182 = vadd.f32 %v45, %v181
    %v183 = vpop.f32.mrb[0].mxu0
    %184 = vmatprep.mubr.bf16.mxu0 0
    %185 = vmatmul.mubr.bf16.gmra.mrb[0].mxu0 %v112
    %v186 = vpop.f32.mrb[0].mxu0
    %v187 = vadd.f32 %v45, %v186
    %v188 = vpop.f32.mrb[0].mxu0
    %v189 = vpop.f32.mrb[0].mxu0
    %v190 = vadd.f32 %v45, %v189
    %v191 = vpop.f32.mrb[0].mxu0
    %192 = vmatprep.mubr.bf16.mxu0 0
    %193 = vmatmul.mubr.bf16.gmra.mrb[0].mxu0 %v115
    %v194 = vpop.f32.mrb[0].mxu0
    %v195 = vadd.f32 %v45, %v194
    %v196 = vpop.f32.mrb[0].mxu0
    %v197 = vpop.f32.mrb[0].mxu0
    %v198 = vadd.f32 %v45, %v197
    %v199 = vpop.f32.mrb[0].mxu0
    %200 = vmatprep.mubr.bf16.mxu0 0
    %201 = vmatmul.mubr.bf16.gmra.mrb[0].mxu0 %v118
    %v202 = vpop.f32.mrb[0].mxu0
    %v203 = vadd.f32 %v45, %v202
    %v204 = vpop.f32.mrb[0].mxu0
    %v205 = vpop.f32.mrb[0].mxu0
    %v206 = vadd.f32 %v45, %v205
    %v207 = vpop.f32.mrb[0].mxu0
    %208 = vdwg.mxu0
    %v209 = vpack.c.bf16 %v182, %v179
    %v210 = vpack.c.bf16 %v190, %v187
    %v211 = vpack.c.bf16 %v198, %v195
    %v212 = vpack.c.bf16 %v206, %v203
    %v217 = vunpack.c.l.b16 %v209
    %v218 = vunpack.c.h.b16 %v209
    %v219 = vunpack.c.l.b16 %v210
    %v220 = vunpack.c.h.b16 %v210
    %v221 = vunpack.c.l.b16 %v211
    %v222 = vunpack.c.h.b16 %v211
    %v223 = vunpack.c.l.b16 %v212
    %v224 = vunpack.c.h.b16 %v212
    %v225 = vpack.c.b16 %v217, %v217
    %v226 = vpack.c.b16 %v218, %v218
    %v227 = vpack.c.b16 %v219, %v219
    %v228 = vpack.c.b16 %v220, %v220
    %v229 = vpack.c.b16 %v221, %v221
    %v230 = vpack.c.b16 %v222, %v222
    %v231 = vpack.c.b16 %v223, %v223
    %v232 = vpack.c.b16 %v224, %v224
    %241 = vst [vmem:[#allocation2] sm:$0xf] %v225
    %242 = vst [vmem:[#allocation2 + $0x4] sm:$0xf] %v226
    %243 = vst [vmem:[#allocation2 + $0x8] sm:$0xf] %v227
    %244 = vst [vmem:[#allocation2 + $0xc] sm:$0xf] %v228
    %245 = vst [vmem:[#allocation2 + $0x10] sm:$0xf] %v229
    %246 = vst [vmem:[#allocation2 + $0x14] sm:$0xf] %v230
    %247 = vst [vmem:[#allocation2 + $0x18] sm:$0xf] %v231
    %248 = vst [vmem:[#allocation2 + $0x1c] sm:$0xf] %v232
    // Predicated region
    $region14: #{tpu_custom_call.1} parent=1 // pred_check
      _
    $region15: #{tpu_custom_call.1} parent=1 // pred_check_branch
      %250 = sbr.rel (0) target = $region17
    $region16: #{tpu_custom_call.1} parent=1 // pred_region
      %s252 = ssub.s32 512, 512
      %253 = vsyncadd [#allocation3], %s252
      %s254 = sshll.u32 [#allocation2], 4
      %s255 = int_to_ptr.vmem [resolvable:$true] %s254
      %260 = dma.vmem_to_hbm [thread:$0]  %s255, 512, %s3, [#allocation3], 64, 64, 4
    $region17: #{tpu_custom_call.1} parent=1 // pred_fallthru
      _
    // Predicated region
    $region18: #{tpu_custom_call.1} parent=1 // pred_check
      _
    $region19: #{tpu_custom_call.1} parent=1 // pred_check_branch
      %262 = sbr.rel (0) target = $region21
    $region20: #{tpu_custom_call.1} parent=1 // pred_region
      %263 = dma.done [#allocation3], 512
    $region21: #{tpu_custom_call.1} parent=1 // pred_fallthru
      _
    %264 = vsyncpa [#allocation3], 1

</llo_original>
